<compile_context>
chip_gen: v6e
topology: v6e:2x2x1
jax: 0.10.0
libtpu: 0.0.40
codegen_flags: <defaults>
</compile_context>

<pallas_src>
import functools

import jax
import jax.numpy as jnp
from jax.experimental import pallas as pl
from jax.experimental.pallas import tpu as pltpu

B, IN, OUT = 10, 20, 10


def linear_select_kernel(x_ref, wb_ref, o_ref):
    # x_ref  : (B, IN)       VMEM
    # wb_ref : (IN + 1, OUT) VMEM  -- rows 0..IN-1 = weight^T, row IN = bias
    # o_ref  : (B, OUT)      VMEM
    x = x_ref[...]
    w = wb_ref[:IN, :]            # (IN, OUT)  static slice of the ref (zero cost)
    b = wb_ref[IN:IN + 1, :]      # (1, OUT)
    v1 = jnp.dot(x, w, preferred_element_type=jnp.float32) + b
    # Folded select: where(v1 > 0 and x_sub >= 0, x_sub, v1)
    x_sub = x[:, :OUT] * 0.2
    o_ref[...] = jnp.where((v1 > 0) & (x_sub >= 0), x_sub, v1)


def pack_params(weight, bias):
    """One-time packing at parameter-creation time (NOT per forward call).

    (OUT, IN) weight + (OUT,) bias  ->  (IN+1, OUT): weight pre-transposed,
    bias appended as the last row, so the kernel needs a single input DMA and
    a plain (1,0)-contraction on the MXU.
    """
    return jnp.concatenate(
        [jnp.asarray(weight, jnp.float32).T,
         jnp.asarray(bias, jnp.float32)[None, :]], axis=0)


@functools.partial(jax.jit, static_argnames=())
def model_forward(x1, wb):
    """x1: (10, 1, 20, 1) f32; wb: (IN+1, OUT) f32 packed parameters."""
    # Contiguous reshape -> bitcast, no copy.
    x2d = jnp.reshape(x1, (B, IN)).astype(jnp.float32)

    vmem = pl.BlockSpec(memory_space=pltpu.MemorySpace.VMEM)
    return pl.pallas_call(
        linear_select_kernel,
        out_shape=jax.ShapeDtypeStruct((B, OUT), jnp.float32),
        in_specs=[vmem, vmem],
        out_specs=vmem,
        cost_estimate=pl.CostEstimate(
            flops=2 * B * IN * OUT,
            transcendentals=0,
            bytes_accessed=(B * IN + (IN + 1) * OUT + B * OUT) * 4,
        ),
    )(x2d, wb)


if __name__ == "__main__":
    key = jax.random.PRNGKey(0)
    kx, kw, kb = jax.random.split(key, 3)

    # Input matching the module: torch.randn(10, 1, 20, 1)
    x1 = jax.random.normal(kx, (10, 1, 20, 1), dtype=jnp.float32)

    # Deterministic Linear(20, 10) parameters (PyTorch-style uniform init).
    bound = 1.0 / (IN ** 0.5)
    weight = jax.random.uniform(kw, (OUT, IN), minval=-bound, maxval=bound,
                                dtype=jnp.float32)
    bias = jax.random.uniform(kb, (OUT,), minval=-bound, maxval=bound,
                              dtype=jnp.float32)

    wb = pack_params(weight, bias)          # one-time, outside the hot path

    out = model_forward(x1, wb)
    out = jax.block_until_ready(out)
    assert out.shape == (B, OUT) and out.dtype == jnp.float32

    # Sanity-check against a pure-JAX reference of the same (approximated) math.
    xr = jnp.reshape(x1, (B, IN))
    v1 = xr @ weight.T + bias
    x_sub = xr[:, :OUT] * 0.2
    v4 = jnp.where(v1 > 0, x_sub, v1)
    ref = jnp.where(v4 >= 0, v4, v1)
    assert jnp.allclose(out, ref, atol=1e-5, rtol=1e-5)

    print("KERNEL_OK")
</pallas_src>

<mosaic_0001>
module attributes {stable_mosaic.version = 11 : i64} {
  func.func @linear_select_kernel(%arg0: memref<10x20xf32, #tpu.memory_space<vmem>>, %arg1: memref<21x10xf32, #tpu.memory_space<vmem>>, %arg2: memref<10x10xf32, #tpu.memory_space<vmem>>) attributes {dimension_semantics = [], scalar_prefetch = 0 : i64, scratch_operands = 0 : i64, tpu.core_type = #tpu.core_type<tc>} {
    %c0 = arith.constant 0 : index
    %c0_0 = arith.constant 0 : index
    %0 = vector.load %arg0[%c0, %c0_0] : memref<10x20xf32, #tpu.memory_space<vmem>>, vector<10x20xf32>
    %c0_1 = arith.constant 0 : index
    %c0_2 = arith.constant 0 : index
    %1 = vector.load %arg1[%c0_1, %c0_2] : memref<21x10xf32, #tpu.memory_space<vmem>>, vector<20x10xf32>
    %c20 = arith.constant 20 : index
    %c0_3 = arith.constant 0 : index
    %2 = vector.load %arg1[%c20, %c0_3] : memref<21x10xf32, #tpu.memory_space<vmem>>, vector<1x10xf32>
    %cst = arith.constant dense<0.000000e+00> : vector<10x10xf32>
    %3 = tpu.matmul %0, %1, %cst {dimension_numbers = #tpu.dot_dimension_numbers<[1], [0], [0], [1], [0, 0, 1, 1], [], []>} : vector<10x20xf32>, vector<20x10xf32>, vector<10x10xf32> -> vector<10x10xf32>
    %4 = vector.broadcast %2 : vector<1x10xf32> to vector<10x10xf32>
    %5 = arith.addf %3, %4 : vector<10x10xf32>
    %6 = vector.extract_strided_slice %0 {offsets = [0, 0], sizes = [10, 10], strides = [1, 1]} : vector<10x20xf32> to vector<10x10xf32>
    %cst_4 = arith.constant 2.000000e-01 : f32
    %7 = vector.broadcast %cst_4 : f32 to vector<10x10xf32>
    %8 = arith.mulf %6, %7 : vector<10x10xf32>
    %cst_5 = arith.constant 0.000000e+00 : f32
    %9 = vector.broadcast %cst_5 : f32 to vector<10x10xf32>
    %10 = arith.cmpf ogt, %5, %9 : vector<10x10xf32>
    %cst_6 = arith.constant 0.000000e+00 : f32
    %11 = vector.broadcast %cst_6 : f32 to vector<10x10xf32>
    %12 = arith.cmpf oge, %8, %11 : vector<10x10xf32>
    %13 = arith.andi %10, %12 : vector<10x10xi1>
    %14 = arith.select %13, %8, %5 : vector<10x10xi1>, vector<10x10xf32>
    %c0_7 = arith.constant 0 : index
    %c0_8 = arith.constant 0 : index
    %15 = vector.load %arg2[%c0_7, %c0_8] : memref<10x10xf32, #tpu.memory_space<vmem>>, vector<10x10xf32>
    tpu.vector_store %arg2[%c0_7, %c0_8], %14 {strides = array<i32>} : memref<10x10xf32, #tpu.memory_space<vmem>>, vector<10x10xf32>,
    return
  }
}

</mosaic_0001>

<llo_original>
// kernel: model_forward.1
$region0: #{model_forward.1}
  #allocation0 [shape = 'u32[]', space=smem, size = 0x4, offset = 0x4, fixed_abs, tag = 'smem constant byte address 0x4 - core index']
  #allocation1 [shape = 'u32[144,128]{1,0:T(1,128)}', space=vmem, size = 0x12000, scoped, tag = 'internal scratch']
  %s0 = inlined_call_operand.vmem [shape: f32[10,20], index: 0, kind: input, shape index: {}]
  %s1 = inlined_call_operand.vmem [shape: f32[21,10], index: 1, kind: input, shape index: {}]
  %s2 = inlined_call_operand.hbm [shape: f32[10,10], index: 2, kind: output, shape index: {}]
  %s3 = sld [smem:[#allocation0]]
  $region18: #{model_forward.1} parent=0
    _
  %s5 = ssub.s32 1, %s3
  %s6 = scalar_select 0, %s5, %s3
  $region1: #{model_forward.1} parent=0
    #allocation2 [shape = 'u8[8192]{0}', space=vmem, size = 0x2000, scoped, tag = 'output window, operand 0, single buffered']
    #allocation3 [shape = 's32[1]{0}', space=sflag, size = 0x4, scoped, tag = 'scoped memory for model_forward.1']
    %7 = vsyncpa [#allocation3], 0
    // Predicated region
    $region2: #{model_forward.1} parent=1 // pred_check
      _
    $region3: #{model_forward.1} parent=1 // pred_check_branch
      %9 = sbr.rel (0) target = $region5
    $region4: #{model_forward.1} parent=1 // pred_region
      _
    $region5: #{model_forward.1} parent=1 // pred_fallthru
      _
    // Predicated region
    $region6: #{model_forward.1} parent=1 // pred_check
      _
    $region7: #{model_forward.1} parent=1 // pred_check_branch
      %11 = sbr.rel (0) target = $region9
    $region8: #{model_forward.1} parent=1 // pred_region
      _
    $region9: #{model_forward.1} parent=1 // pred_fallthru
      _
    %v12 = vld [vmem:[%s0] sm:$0xff]
    %v13 = vld [vmem:[%s0 + $0x8] sm:$0x3]
    %v14 = vld [vmem:[%s1] sm:$0xff]
    %v15 = vld [vmem:[%s1 + $0x8] sm:$0xff]
    %v16 = vld [vmem:[%s1 + $0x10] sm:$0xf]
    %v17 = vld [vmem:[%s1 + $0x14] sm:$0x1]
    %v18 = vlaneseq
    %v19 = vshrl.u32 %v18, 7
    %v20 = vsub.s32 0, %v19
    %v21 = vrot.slane %v17, %v20
    %vm22 = vcmask 162816
    %v24 = vsel %vm22, %v12, 0
    %v27 = vsel %vm22, %v13, 0
    %vm29 = vcmask 1043456
    %v31 = vsel %vm29, %v16, 0
    %33 = vmatprep.subr.mxu0 0.0
    %34 = vmatpush1.msra.mxu0 0.0
    %35 = vmatprep.subr.mxu0 0.0
    %36 = vmatpush1.msra.mxu0 0.0
    %37 = vmatprep.subr.mxu0 0.0
    %38 = vmatpush1.msra.mxu0 0.0
    %39 = vmatprep.subr.mxu0 0.0
    %40 = vmatpush1.msra.mxu0 0.0
    %41 = vmatprep.subr.mxu0 0.0
    %42 = vmatpush1.msra.mxu0 0.0
    %43 = vmatprep.subr.mxu0 0.0
    %44 = vmatpush1.msra.mxu0 0.0
    %45 = vmatprep.subr.mxu0 0.0
    %46 = vmatpush1.msra.mxu0 0.0
    %47 = vmatprep.subr.mxu0 0.0
    %48 = vmatpush1.msra.mxu0 0.0
    %49 = vmatprep.subr.mxu0 0.0
    %50 = vmatpush1.msra.mxu0 0.0
    %51 = vmatprep.subr.mxu0 0.0
    %52 = vmatpush1.msra.mxu0 0.0
    %53 = vmatprep.subr.mxu0 0.0
    %54 = vmatpush1.msra.mxu0 0.0
    %55 = vmatprep.subr.mxu0 0.0
    %56 = vmatpush1.msra.mxu0 0.0
    %57 = vmatprep.subr.mxu0 0.0
    %58 = vmatpush1.msra.mxu0 0.0
    %59 = vmatprep.subr.mxu0 0.0
    %60 = vmatpush1.msra.mxu0 %v31
    %61 = vmatprep.subr.mxu0 0.0
    %62 = vmatpush1.msra.mxu0 %v15
    %63 = vmatprep.subr.mxu0 0.0
    %64 = vmatpush1.msra.mxu0 %v14
    %65 = vmatprep.subr.mxu0 0.0
    %66 = vmatpush2.msra.mxu0 0.0
    %67 = vmatprep.subr.mxu0 0.0
    %68 = vmatpush2.msra.mxu0 0.0
    %69 = vmatprep.subr.mxu0 0.0
    %70 = vmatpush2.msra.mxu0 0.0
    %71 = vmatprep.subr.mxu0 0.0
    %72 = vmatpush2.msra.mxu0 0.0
    %73 = vmatprep.subr.mxu0 0.0
    %74 = vmatpush2.msra.mxu0 0.0
    %75 = vmatprep.subr.mxu0 0.0
    %76 = vmatpush2.msra.mxu0 0.0
    %77 = vmatprep.subr.mxu0 0.0
    %78 = vmatpush2.msra.mxu0 0.0
    %79 = vmatprep.subr.mxu0 0.0
    %80 = vmatpush2.msra.mxu0 0.0
    %81 = vmatprep.subr.mxu0 0.0
    %82 = vmatpush2.msra.mxu0 0.0
    %83 = vmatprep.subr.mxu0 0.0
    %84 = vmatpush2.msra.mxu0 0.0
    %85 = vmatprep.subr.mxu0 0.0
    %86 = vmatpush2.msra.mxu0 0.0
    %87 = vmatprep.subr.mxu0 0.0
    %88 = vmatpush2.msra.mxu0 0.0
    %89 = vmatprep.subr.mxu0 0.0
    %90 = vmatpush2.msra.mxu0 0.0
    %91 = vmatprep.subr.mxu0 0.0
    %92 = vmatpush2.msra.mxu0 0.0
    %93 = vmatprep.subr.mxu0 0.0
    %94 = vmatpush2.msra.mxu0 0.0
    %95 = vmatprep.subr.mxu0 0.0
    %96 = vmatpush2.msra.mxu0 0.0
    %97 = vmatprep.mubr.f32.mxu0 0.0
    %98 = vmatmul.mubr.f32.gmra.mxu0 %v24
    %v99 = vpop.f32.mrf.mxu0
    %v100 = vadd.f32 %v21, %v99
    %v101 = vpop.f32.mrf.mxu0
    %102 = vmatprep.mubr.f32.mxu0 0.0
    %103 = vmatmul.mubr.f32.gmra.mxu0 %v27
    %v104 = vpop.f32.mrf.mxu0
    %v105 = vadd.f32 %v21, %v104
    %v106 = vpop.f32.mrf.mxu0
    %107 = vdwg.mxu0
    %v108 = vmul.f32 %v12, 0.2
    %v109 = vmul.f32 %v13, 0.2
    %vm110 = vcmp.gt.f32.partialorder %v100, 0.0
    %vm111 = vcmp.gt.f32.partialorder %v105, 0.0
    %vm112 = vcmp.ge.f32.partialorder %v108, 0.0
    %vm113 = vcmp.ge.f32.partialorder %v109, 0.0
    %vm114 = vmand %vm110, %vm112
    %vm115 = vmand %vm111, %vm113
    %v116 = vsel %vm114, %v108, %v100
    %v117 = vsel %vm115, %v109, %v105
    %vm118 = vcmask 80896
    %119 = vst.msk [vmem:[#allocation2] sm:$0xff] %vm118, %v116
    %vm120 = vcmask 74752
    %121 = vst.msk [vmem:[#allocation2 + $0x8] sm:$0x3] %vm120, %v117
    // Predicated region
    $region10: #{model_forward.1} parent=1 // pred_check
      _
    $region11: #{model_forward.1} parent=1 // pred_check_branch
      %123 = sbr.rel (0) target = $region13
    $region12: #{model_forward.1} parent=1 // pred_region
      %s125 = ssub.s32 256, 256
      %126 = vsyncadd [#allocation3], %s125
      %s127 = sshll.u32 [#allocation2], 4
      %s128 = int_to_ptr.vmem [resolvable:$true] %s127
      %133 = dma.vmem_to_hbm [thread:$0]  %s128, 256, %s2, [#allocation3], 128, 128, 8
    $region13: #{model_forward.1} parent=1 // pred_fallthru
      _
    // Predicated region
    $region14: #{model_forward.1} parent=1 // pred_check
      _
    $region15: #{model_forward.1} parent=1 // pred_check_branch
      %135 = sbr.rel (0) target = $region17
    $region16: #{model_forward.1} parent=1 // pred_region
      %136 = dma.done [#allocation3], 256
    $region17: #{model_forward.1} parent=1 // pred_fallthru
      _
    %137 = vsyncpa [#allocation3], 1

</llo_original>
